<compile_context>
chip_gen: v7x
topology: tpu7x:2x2x1
jax: 0.10.0
libtpu: 0.0.40
codegen_flags: <defaults>
</compile_context>

<pallas_src>
import functools

import jax
import jax.numpy as jnp
from jax.experimental import pallas as pl
from jax.experimental.pallas import tpu as pltpu

HIDDEN = 64     # ParallelBranch hidden_size is hard-coded to 64 in the module
SUBLANE = 8
LANE = 128


def _round_up(n, m):
    return (n + m - 1) // m * m


# ------------------------------ Pallas kernel -------------------------------

def _zdrn_fused_kernel(*refs):
    """Whole ZDRN forward in one kernel.

    refs = (x_ref, W0, b0, W1, b1, ..., W_fc, b_fc, out_ref)

    Each layer is one lane-dense (B, Din) x (Din, 64*num_branches) bf16 matmul
    (per-branch weights fused + packed along N on the host) with f32 accumulate,
    f32 bias add and f32 SiLU; all intermediates stay in vregs/VMEM.
    """
    x_ref = refs[0]
    o_ref = refs[-1]
    w_refs = refs[1:-1]
    n_layers = (len(w_refs) - 2) // 2

    h = x_ref[...]                      # f32 activations
    rows = h.shape[0]

    def bias(b_ref):
        # Biases are pre-broadcast to (SUBLANE, N) on the host; take a view
        # that needs no in-kernel sublane broadcast when rows <= SUBLANE.
        return b_ref[0:rows, :] if rows <= SUBLANE else b_ref[0:1, :]

    for layer in range(n_layers):       # trace-time unroll (tiny depth)
        W = w_refs[2 * layer][...]      # bf16 fused weights
        pre = jnp.dot(h.astype(W.dtype), W,
                      preferred_element_type=jnp.float32) + bias(w_refs[2 * layer + 1])
        h = pre * jax.nn.sigmoid(pre)   # SiLU, f32 elementwise (v5e-safe)

    Wf = w_refs[-2][...]                # bf16 fc weight, lane-padded N
    o_ref[...] = jnp.dot(h.astype(Wf.dtype), Wf,
                         preferred_element_type=jnp.float32) + bias(w_refs[-1])


# --------------------------- parameter handling -----------------------------

def _linear_params(key, fan_in, fan_out):
    kw, kb = jax.random.split(key)
    bound = 1.0 / float(fan_in) ** 0.5
    W = jax.random.uniform(kw, (fan_in, fan_out), jnp.float32, -bound, bound)
    b = jax.random.uniform(kb, (1, fan_out), jnp.float32, -bound, bound)
    return W, b


def init_zdrn(key, input_size, num_branches, num_layers, output_size):
    """Per-branch parameters mirroring the torch module structure."""
    params = {"layers": []}
    in_size = input_size
    for _ in range(num_layers):
        branches = []
        for _b in range(num_branches):
            key, k1, k2, k3 = jax.random.split(key, 4)
            Ws, bs = _linear_params(k1, in_size, HIDDEN)        # scattered_layer
            Wv, bv = _linear_params(k2, HIDDEN, HIDDEN)         # attention.value
            # TODO(synk): attention.query / attention.key exist in the torch
            # module but cannot affect the output when seq_len == 1; omitted.
            if in_size != HIDDEN:
                Wsc, bsc = _linear_params(k3, in_size, HIDDEN)  # shortcut Linear
            else:
                Wsc, bsc = None, None                           # identity path
            branches.append(dict(Ws=Ws, bs=bs, Wv=Wv, bv=bv, Wsc=Wsc, bsc=bsc))
        params["layers"].append(branches)
        in_size = HIDDEN * num_branches
    key, kf = jax.random.split(key)
    params["fc"] = _linear_params(kf, in_size, output_size)
    return params


def fuse_params(params, w_dtype=jnp.bfloat16):
    """Host-side one-time fusion + lane-dense N-packing of per-branch weights.

    Weights are stored in bf16 (matmul inputs); biases are kept in f32 and
    pre-broadcast to SUBLANE rows.  Packed widths are padded to multiples of
    128 lanes (a no-op for num_branches == 2); padded columns produce exact
    zeros through SiLU, and the next layer's fan-in is zero-row padded to match.
    """
    fused_layers = []
    prev_pad = 0
    for layer in params["layers"]:
        W_cols, b_cols = [], []
        for p in layer:
            Wf = jnp.dot(p["Ws"], p["Wv"], precision="highest")
            bf = jnp.dot(p["bs"], p["Wv"], precision="highest") + p["bv"]
            if p["Wsc"] is not None:
                Wf = Wf + p["Wsc"]
                bf = bf + p["bsc"]
            else:
                # identity shortcut (in_size == HIDDEN): fold eye into the weight
                Wf = Wf + jnp.eye(HIDDEN, dtype=jnp.float32)
            W_cols.append(Wf)
            b_cols.append(bf)
        W = jnp.concatenate(W_cols, axis=1)
        b = jnp.concatenate(b_cols, axis=1)
        if prev_pad:  # account for zero-padded output columns of previous layer
            W = jnp.concatenate(
                [W, jnp.zeros((prev_pad, W.shape[1]), W.dtype)], axis=0)
        n_true = W.shape[1]
        n_pad = _round_up(n_true, LANE)
        if n_pad != n_true:
            W = jnp.concatenate(
                [W, jnp.zeros((W.shape[0], n_pad - n_true), W.dtype)], axis=1)
            b = jnp.concatenate(
                [b, jnp.zeros((1, n_pad - n_true), b.dtype)], axis=1)
        prev_pad = n_pad - n_true
        fused_layers.append(
            (W.astype(w_dtype),
             jnp.broadcast_to(b, (SUBLANE, n_pad)).astype(jnp.float32)))

    Wfc, bfc = params["fc"]
    if prev_pad:
        Wfc = jnp.concatenate(
            [Wfc, jnp.zeros((prev_pad, Wfc.shape[1]), Wfc.dtype)], axis=0)
    out_size = Wfc.shape[1]
    out_pad = _round_up(out_size, LANE)          # lane-dense fc output slab
    Wfc_p = jnp.zeros((Wfc.shape[0], out_pad), jnp.float32).at[:, :out_size].set(Wfc)
    bfc_p = jnp.zeros((1, out_pad), jnp.float32).at[:, :out_size].set(bfc)
    return {"layers": tuple(fused_layers),
            "fc": (Wfc_p.astype(w_dtype),
                   jnp.broadcast_to(bfc_p, (SUBLANE, out_pad)).astype(jnp.float32)),
            "out_size": out_size}


# ------------------------------ forward passes -------------------------------

@functools.partial(jax.jit, static_argnames=("out_size",))
def _zdrn_forward_jit(x, layers, Wfc, bfc, *, out_size):
    flat = [x]
    for W, b in layers:
        flat += [W, b]
    flat += [Wfc, bfc]
    out_pad = Wfc.shape[1]

    vmem = pl.BlockSpec(memory_space=pltpu.MemorySpace.VMEM)
    out = pl.pallas_call(
        _zdrn_fused_kernel,
        in_specs=[vmem] * len(flat),
        out_specs=vmem,
        out_shape=jax.ShapeDtypeStruct((x.shape[0], out_pad), jnp.float32),
        compiler_params=pltpu.CompilerParams(vmem_limit_bytes=32 * 1024 * 1024),
    )(*flat)
    return out[:, :out_size]                     # lane slice fuses under jit


def zdrn_forward(x, fused):
    """x: (B, input_size) f32  ->  (B, output_size) f32."""
    Wfc, bfc = fused["fc"]
    return _zdrn_forward_jit(x, fused["layers"], Wfc, bfc,
                             out_size=fused["out_size"])


def zdrn_reference(x, params):
    """Pure-JAX f32 reference implementing the original (unfused) module math."""
    def lin(x, W, b):
        return jnp.dot(x, W, precision="highest") + b
    for layer in params["layers"]:
        outs = []
        for p in layer:
            s = lin(x, p["Ws"], p["bs"])
            v = lin(s, p["Wv"], p["bv"])            # attention @ seq_len==1
            ident = x if p["Wsc"] is None else lin(x, p["Wsc"], p["bsc"])
            pre = v + ident
            outs.append(pre * jax.nn.sigmoid(pre))  # SiLU
        x = jnp.concatenate(outs, axis=1)
    Wf, bf = params["fc"]
    return lin(x, Wf, bf)


# ----------------------------------- main ------------------------------------

if __name__ == "__main__":
    key = jax.random.PRNGKey(0)
    k_param, k_x = jax.random.split(key)

    input_size, num_branches, num_layers, output_size = 32, 2, 2, 8
    batch = 2

    params = init_zdrn(k_param, input_size, num_branches, num_layers, output_size)
    fused = fuse_params(params)
    x = jax.random.normal(k_x, (batch, input_size), jnp.float32)

    out = jax.block_until_ready(zdrn_forward(x, fused))
    ref = jax.block_until_ready(zdrn_reference(x, params))

    assert out.shape == (batch, output_size), out.shape
    # bf16 matmul inputs with f32 accumulation vs. pure-f32 reference.
    assert jnp.allclose(out, ref, rtol=2e-2, atol=2e-2), \
        f"max abs diff {jnp.max(jnp.abs(out - ref))}"

    print("KERNEL_OK")
</pallas_src>

<mosaic_0001>
module attributes {stable_mosaic.version = 11 : i64} {
  func.func @_zdrn_fused_kernel(%arg0: memref<2x32xf32, #tpu.memory_space<vmem>>, %arg1: memref<32x128xbf16, #tpu.memory_space<vmem>>, %arg2: memref<8x128xf32, #tpu.memory_space<vmem>>, %arg3: memref<128x128xbf16, #tpu.memory_space<vmem>>, %arg4: memref<8x128xf32, #tpu.memory_space<vmem>>, %arg5: memref<128x128xbf16, #tpu.memory_space<vmem>>, %arg6: memref<8x128xf32, #tpu.memory_space<vmem>>, %arg7: memref<2x128xf32, #tpu.memory_space<vmem>>) attributes {dimension_semantics = [], scalar_prefetch = 0 : i64, scratch_operands = 0 : i64, tpu.core_type = #tpu.core_type<tc>} {
    %c0 = arith.constant 0 : index
    %c0_0 = arith.constant 0 : index
    %0 = vector.load %arg0[%c0, %c0_0] : memref<2x32xf32, #tpu.memory_space<vmem>>, vector<2x32xf32>
    %c0_1 = arith.constant 0 : index
    %c0_2 = arith.constant 0 : index
    %1 = vector.load %arg1[%c0_1, %c0_2] : memref<32x128xbf16, #tpu.memory_space<vmem>>, vector<32x128xbf16>
    %2 = arith.truncf %0 : vector<2x32xf32> to vector<2x32xbf16>
    %cst = arith.constant dense<0.000000e+00> : vector<2x128xf32>
    %3 = tpu.matmul %2, %1, %cst {dimension_numbers = #tpu.dot_dimension_numbers<[1], [0], [0], [1], [0, 0, 1, 1], [], []>} : vector<2x32xbf16>, vector<32x128xbf16>, vector<2x128xf32> -> vector<2x128xf32>
    %c0_3 = arith.constant 0 : index
    %c0_4 = arith.constant 0 : index
    %4 = vector.load %arg2[%c0_3, %c0_4] : memref<8x128xf32, #tpu.memory_space<vmem>>, vector<2x128xf32>
    %5 = arith.addf %3, %4 : vector<2x128xf32>
    %6 = arith.negf %5 : vector<2x128xf32>
    %7 = math.exp %6 : vector<2x128xf32>
    %cst_5 = arith.constant 1.000000e+00 : f32
    %8 = vector.broadcast %cst_5 : f32 to vector<2x128xf32>
    %9 = arith.addf %8, %7 : vector<2x128xf32>
    %10 = arith.divf %8, %9 : vector<2x128xf32>
    %11 = arith.mulf %5, %10 : vector<2x128xf32>
    %c0_6 = arith.constant 0 : index
    %c0_7 = arith.constant 0 : index
    %12 = vector.load %arg3[%c0_6, %c0_7] : memref<128x128xbf16, #tpu.memory_space<vmem>>, vector<128x128xbf16>
    %13 = arith.truncf %11 : vector<2x128xf32> to vector<2x128xbf16>
    %cst_8 = arith.constant dense<0.000000e+00> : vector<2x128xf32>
    %14 = tpu.matmul %13, %12, %cst_8 {dimension_numbers = #tpu.dot_dimension_numbers<[1], [0], [0], [1], [0, 0, 1, 1], [], []>} : vector<2x128xbf16>, vector<128x128xbf16>, vector<2x128xf32> -> vector<2x128xf32>
    %c0_9 = arith.constant 0 : index
    %c0_10 = arith.constant 0 : index
    %15 = vector.load %arg4[%c0_9, %c0_10] : memref<8x128xf32, #tpu.memory_space<vmem>>, vector<2x128xf32>
    %16 = arith.addf %14, %15 : vector<2x128xf32>
    %17 = arith.negf %16 : vector<2x128xf32>
    %18 = math.exp %17 : vector<2x128xf32>
    %cst_11 = arith.constant 1.000000e+00 : f32
    %19 = vector.broadcast %cst_11 : f32 to vector<2x128xf32>
    %20 = arith.addf %19, %18 : vector<2x128xf32>
    %21 = arith.divf %19, %20 : vector<2x128xf32>
    %22 = arith.mulf %16, %21 : vector<2x128xf32>
    %c0_12 = arith.constant 0 : index
    %c0_13 = arith.constant 0 : index
    %23 = vector.load %arg5[%c0_12, %c0_13] : memref<128x128xbf16, #tpu.memory_space<vmem>>, vector<128x128xbf16>
    %24 = arith.truncf %22 : vector<2x128xf32> to vector<2x128xbf16>
    %cst_14 = arith.constant dense<0.000000e+00> : vector<2x128xf32>
    %25 = tpu.matmul %24, %23, %cst_14 {dimension_numbers = #tpu.dot_dimension_numbers<[1], [0], [0], [1], [0, 0, 1, 1], [], []>} : vector<2x128xbf16>, vector<128x128xbf16>, vector<2x128xf32> -> vector<2x128xf32>
    %c0_15 = arith.constant 0 : index
    %c0_16 = arith.constant 0 : index
    %26 = vector.load %arg6[%c0_15, %c0_16] : memref<8x128xf32, #tpu.memory_space<vmem>>, vector<2x128xf32>
    %27 = arith.addf %25, %26 : vector<2x128xf32>
    %c0_17 = arith.constant 0 : index
    %c0_18 = arith.constant 0 : index
    %28 = vector.load %arg7[%c0_17, %c0_18] : memref<2x128xf32, #tpu.memory_space<vmem>>, vector<2x128xf32>
    tpu.vector_store %arg7[%c0_17, %c0_18], %27 {strides = array<i32>} : memref<2x128xf32, #tpu.memory_space<vmem>>, vector<2x128xf32>,
    return
  }
}

</mosaic_0001>

<llo_original>
// kernel: _zdrn_forward_jit.1
$region0: #{_zdrn_forward_jit.1}
  #allocation0 [shape = 'u32[]', space=smem, size = 0x4, offset = 0x4, fixed_abs, tag = 'smem constant byte address 0x4 - core index']
  #allocation1 [shape = 'u32[144,128]{1,0:T(1,128)}', space=vmem, size = 0x12000, scoped, tag = 'internal scratch']
  %s0 = inlined_call_operand.hbm [shape: f32[2,32], index: 0, kind: input, shape index: {}]
  %s1 = inlined_call_operand.hbm [shape: bf16[32,128], index: 1, kind: input, shape index: {}]
  %s2 = inlined_call_operand.hbm [shape: f32[8,128], index: 2, kind: input, shape index: {}]
  %s3 = inlined_call_operand.hbm [shape: bf16[128,128], index: 3, kind: input, shape index: {}]
  %s4 = inlined_call_operand.vmem [shape: f32[8,128], index: 4, kind: input, shape index: {}]
  %s5 = inlined_call_operand.hbm [shape: bf16[128,128], index: 5, kind: input, shape index: {}]
  %s6 = inlined_call_operand.vmem [shape: f32[8,128], index: 6, kind: input, shape index: {}]
  %s7 = inlined_call_operand.hbm [shape: f32[2,128], index: 7, kind: output, shape index: {}]
  %s8 = sld [smem:[#allocation0]]
  $region58: #{_zdrn_forward_jit.1} parent=0
    _
  %s10 = ssub.s32 1, %s8
  %s11 = scalar_select 0, %s10, %s8
  $region1: #{_zdrn_forward_jit.1} parent=0
    #allocation2 [shape = 'u8[1024]{0}', space=vmem, size = 0x400, scoped, tag = 'input window, operand 0, single buffered']
    #allocation3 [shape = 's32[1]{0}', space=sflag, size = 0x4, scoped, tag = 'scoped memory for _zdrn_forward_jit.1']
    #allocation4 [shape = 's32[1]{0}', space=sflag, size = 0x4, scoped, tag = 'scoped memory for _zdrn_forward_jit.1']
    #allocation5 [shape = 'u8[8192]{0}', space=vmem, size = 0x2000, scoped, tag = 'input window, operand 1, single buffered']
    #allocation6 [shape = 's32[1]{0}', space=sflag, size = 0x4, scoped, tag = 'scoped memory for _zdrn_forward_jit.1']
    #allocation7 [shape = 'u8[4096]{0}', space=vmem, size = 0x1000, scoped, tag = 'input window, operand 2, single buffered']
    #allocation8 [shape = 'u8[32768]{0}', space=vmem, size = 0x8000, scoped, tag = 'input window, operand 3, single buffered']
    #allocation9 [shape = 's32[1]{0}', space=sflag, size = 0x4, scoped, tag = 'scoped memory for _zdrn_forward_jit.1']
    #allocation10 [shape = 'u8[32768]{0}', space=vmem, size = 0x8000, scoped, tag = 'input window, operand 5, single buffered']
    #allocation11 [shape = 'u8[1024]{0}', space=vmem, size = 0x400, scoped, tag = 'output window, operand 0, single buffered']
    %12 = vsyncpa [#allocation3], 0
    %13 = vsyncpa [#allocation6], 0
    %14 = vsyncpa [#allocation9], 0
    %15 = vsyncpa [#allocation4], 0
    // Predicated region
    $region2: #{_zdrn_forward_jit.1} parent=1 // pred_check
      _
    $region3: #{_zdrn_forward_jit.1} parent=1 // pred_check_branch
      %17 = sbr.rel (0) target = $region5
    $region4: #{_zdrn_forward_jit.1} parent=1 // pred_region
      %s19 = ssub.s32 32, 32
      %20 = vsyncadd [#allocation3], %s19
      %s22 = sshll.u32 [#allocation2], 4
      %s23 = int_to_ptr.vmem [resolvable:$true] %s22
      %25 = dma.hbm_to_vmem [thread:$0]  %s0, 32, %s23, [#allocation3]
    $region5: #{_zdrn_forward_jit.1} parent=1 // pred_fallthru
      _
    // Predicated region
    $region6: #{_zdrn_forward_jit.1} parent=1 // pred_check
      _
    $region7: #{_zdrn_forward_jit.1} parent=1 // pred_check_branch
      %27 = sbr.rel (0) target = $region9
    $region8: #{_zdrn_forward_jit.1} parent=1 // pred_region
      %s29 = ssub.s32 256, 256
      %30 = vsyncadd [#allocation6], %s29
      %s31 = sshll.u32 [#allocation5], 4
      %s32 = int_to_ptr.vmem [resolvable:$true] %s31
      %37 = dma.hbm_to_vmem [thread:$0]  %s1, 256, %s32, [#allocation6], 64, 64, 4
    $region9: #{_zdrn_forward_jit.1} parent=1 // pred_fallthru
      _
    // Predicated region
    $region10: #{_zdrn_forward_jit.1} parent=1 // pred_check
      _
    $region11: #{_zdrn_forward_jit.1} parent=1 // pred_check_branch
      %39 = sbr.rel (0) target = $region13
    $region12: #{_zdrn_forward_jit.1} parent=1 // pred_region
      %s41 = ssub.s32 128, 128
      %42 = vsyncadd [#allocation6], %s41
      %s44 = sshll.u32 [#allocation7], 4
      %s45 = int_to_ptr.vmem [resolvable:$true] %s44
      %47 = dma.hbm_to_vmem [thread:$0]  %s2, 128, %s45, [#allocation6]
    $region13: #{_zdrn_forward_jit.1} parent=1 // pred_fallthru
      _
    // Predicated region
    $region14: #{_zdrn_forward_jit.1} parent=1 // pred_check
      _
    $region15: #{_zdrn_forward_jit.1} parent=1 // pred_check_branch
      %49 = sbr.rel (0) target = $region17
    $region16: #{_zdrn_forward_jit.1} parent=1 // pred_region
      %s51 = ssub.s32 1024, 1024
      %52 = vsyncadd [#allocation9], %s51
      %s53 = sshll.u32 [#allocation8], 4
      %s54 = int_to_ptr.vmem [resolvable:$true] %s53
      %59 = dma.hbm_to_vmem [thread:$0]  %s3, 1024, %s54, [#allocation9], 64, 64, 4
    $region17: #{_zdrn_forward_jit.1} parent=1 // pred_fallthru
      _
    // Predicated region
    $region18: #{_zdrn_forward_jit.1} parent=1 // pred_check
      _
    $region19: #{_zdrn_forward_jit.1} parent=1 // pred_check_branch
      %61 = sbr.rel (0) target = $region21
    $region20: #{_zdrn_forward_jit.1} parent=1 // pred_region
      _
    $region21: #{_zdrn_forward_jit.1} parent=1 // pred_fallthru
      _
    // Predicated region
    $region22: #{_zdrn_forward_jit.1} parent=1 // pred_check
      _
    $region23: #{_zdrn_forward_jit.1} parent=1 // pred_check_branch
      %63 = sbr.rel (0) target = $region25
    $region24: #{_zdrn_forward_jit.1} parent=1 // pred_region
      %s65 = ssub.s32 1024, 1024
      %66 = vsyncadd [#allocation9], %s65
      %s67 = sshll.u32 [#allocation10], 4
      %s68 = int_to_ptr.vmem [resolvable:$true] %s67
      %73 = dma.hbm_to_vmem [thread:$0]  %s5, 1024, %s68, [#allocation9], 64, 64, 4
    $region25: #{_zdrn_forward_jit.1} parent=1 // pred_fallthru
      _
    // Predicated region
    $region26: #{_zdrn_forward_jit.1} parent=1 // pred_check
      _
    $region27: #{_zdrn_forward_jit.1} parent=1 // pred_check_branch
      %75 = sbr.rel (0) target = $region29
    $region28: #{_zdrn_forward_jit.1} parent=1 // pred_region
      _
    $region29: #{_zdrn_forward_jit.1} parent=1 // pred_fallthru
      _
    // Predicated region
    $region30: #{_zdrn_forward_jit.1} parent=1 // pred_check
      _
    $region31: #{_zdrn_forward_jit.1} parent=1 // pred_check_branch
      %77 = sbr.rel (0) target = $region33
    $region32: #{_zdrn_forward_jit.1} parent=1 // pred_region
      %78 = dma.done [#allocation3], 32
    $region33: #{_zdrn_forward_jit.1} parent=1 // pred_fallthru
      _
    // Predicated region
    $region34: #{_zdrn_forward_jit.1} parent=1 // pred_check
      _
    $region35: #{_zdrn_forward_jit.1} parent=1 // pred_check_branch
      %80 = sbr.rel (0) target = $region37
    $region36: #{_zdrn_forward_jit.1} parent=1 // pred_region
      %81 = dma.done [#allocation6], 256
    $region37: #{_zdrn_forward_jit.1} parent=1 // pred_fallthru
      _
    // Predicated region
    $region38: #{_zdrn_forward_jit.1} parent=1 // pred_check
      _
    $region39: #{_zdrn_forward_jit.1} parent=1 // pred_check_branch
      %83 = sbr.rel (0) target = $region41
    $region40: #{_zdrn_forward_jit.1} parent=1 // pred_region
      %84 = dma.done [#allocation6], 128
    $region41: #{_zdrn_forward_jit.1} parent=1 // pred_fallthru
      _
    // Predicated region
    $region42: #{_zdrn_forward_jit.1} parent=1 // pred_check
      _
    $region43: #{_zdrn_forward_jit.1} parent=1 // pred_check_branch
      %86 = sbr.rel (0) target = $region45
    $region44: #{_zdrn_forward_jit.1} parent=1 // pred_region
      %87 = dma.done [#allocation9], 1024
    $region45: #{_zdrn_forward_jit.1} parent=1 // pred_fallthru
      _
    // Predicated region
    $region46: #{_zdrn_forward_jit.1} parent=1 // pred_check
      _
    $region47: #{_zdrn_forward_jit.1} parent=1 // pred_check_branch
      %89 = sbr.rel (0) target = $region49
    $region48: #{_zdrn_forward_jit.1} parent=1 // pred_region
      %90 = dma.done [#allocation9], 1024
    $region49: #{_zdrn_forward_jit.1} parent=1 // pred_fallthru
      _
    %v92 = vld [vmem:[#allocation2] sm:$0x3]
    %v93 = vld [vmem:[#allocation5] sm:$0xf]
    %v94 = vld [vmem:[#allocation5 + $0x4] sm:$0xf]
    %v95 = vld [vmem:[#allocation5 + $0x8] sm:$0xf]
    %v96 = vld [vmem:[#allocation5 + $0xc] sm:$0xf]
    %v97 = vpack.c.bf16 %v92, %v92
    %v98 = vld [vmem:[#allocation7] sm:$0x3]
    %v103 = vunpack.c.l.b16 %v93
    %v104 = vunpack.c.l.b16 %v94
    %v105 = vunpack.c.l.b16 %v95
    %v106 = vunpack.c.l.b16 %v96
    %v107 = vpack.c.b16 %v104, %v103
    %v108 = vpack.c.b16 %v106, %v105
    %vm111 = vcmask 261120
    %v113 = vsel %vm111, %v97, 0
    %115 = vmatprep.subr.bf16.mxu0 0
    %116 = vmatpush1.bf16.msra.mxu0 %v107
    %117 = vmatprep.subr.bf16.mxu0 0
    %118 = vmatpush1.bf16.msra.mxu0 %v108
    %119 = vmatprep.subr.bf16.mxu0 0
    %120 = vmatpush1.bf16.msra.mxu0 0
    %121 = vmatprep.subr.bf16.mxu0 0
    %122 = vmatpush1.bf16.msra.mxu0 0
    %123 = vmatprep.subr.bf16.mxu0 0
    %124 = vmatpush1.bf16.msra.mxu0 0
    %125 = vmatprep.subr.bf16.mxu0 0
    %126 = vmatpush1.bf16.msra.mxu0 0
    %127 = vmatprep.subr.bf16.mxu0 0
    %128 = vmatpush1.bf16.msra.mxu0 0
    %129 = vmatprep.subr.bf16.mxu0 0
    %130 = vmatpush1.bf16.msra.mxu0 0
    %131 = vmatprep.subr.bf16.mxu0 0
    %132 = vmatpush1.bf16.msra.mxu0 0
    %133 = vmatprep.subr.bf16.mxu0 0
    %134 = vmatpush1.bf16.msra.mxu0 0
    %135 = vmatprep.subr.bf16.mxu0 0
    %136 = vmatpush1.bf16.msra.mxu0 0
    %137 = vmatprep.subr.bf16.mxu0 0
    %138 = vmatpush1.bf16.msra.mxu0 0
    %139 = vmatprep.subr.bf16.mxu0 0
    %140 = vmatpush1.bf16.msra.mxu0 0
    %141 = vmatprep.subr.bf16.mxu0 0
    %142 = vmatpush1.bf16.msra.mxu0 0
    %143 = vmatprep.subr.bf16.mxu0 0
    %144 = vmatpush1.bf16.msra.mxu0 0
    %145 = vmatprep.subr.bf16.mxu0 0
    %146 = vmatpush1.bf16.msra.mxu0 0
    %147 = vmatprep.mubr.bf16.mxu0 0
    %148 = vmatmul.mubr.bf16.gmra.mrb[0].mxu0 %v113
    %v149 = vpop.f32.mrb[0].mxu0
    %v150 = vadd.f32 %v98, %v149
    %v151 = vpop.f32.mrb[0].mxu0
    %v152 = vpop.f32.mrb[0].mxu0
    %v153 = vpop.f32.mrb[0].mxu0
    %154 = vdwg.mxu0
    %v155 = vxor.u32 %v150, 2147483648
    %v156 = vmul.f32 %v155, 1.442695
    %v157 = vpow.pop %v156
    %v158 = vadd.f32 %v157, 1.0
    %v159 = vrcp.pop %v158
    %v160 = vmul.f32 1.0, %v159
    %v161 = vmul.f32 %v150, %v160
    %v162 = vld [vmem:[#allocation8] sm:$0xf]
    %v163 = vld [vmem:[#allocation8 + $0x4] sm:$0xf]
    %v164 = vld [vmem:[#allocation8 + $0x8] sm:$0xf]
    %v165 = vld [vmem:[#allocation8 + $0xc] sm:$0xf]
    %v166 = vld [vmem:[#allocation8 + $0x10] sm:$0xf]
    %v167 = vld [vmem:[#allocation8 + $0x14] sm:$0xf]
    %v168 = vld [vmem:[#allocation8 + $0x18] sm:$0xf]
    %v169 = vld [vmem:[#allocation8 + $0x1c] sm:$0xf]
    %v170 = vld [vmem:[#allocation8 + $0x20] sm:$0xf]
    %v171 = vld [vmem:[#allocation8 + $0x24] sm:$0xf]
    %v172 = vld [vmem:[#allocation8 + $0x28] sm:$0xf]
    %v173 = vld [vmem:[#allocation8 + $0x2c] sm:$0xf]
    %v174 = vld [vmem:[#allocation8 + $0x30] sm:$0xf]
    %v175 = vld [vmem:[#allocation8 + $0x34] sm:$0xf]
    %v176 = vld [vmem:[#allocation8 + $0x38] sm:$0xf]
    %v177 = vld [vmem:[#allocation8 + $0x3c] sm:$0xf]
    %v178 = vpack.c.bf16 %v161, %v161
    %v179 = vld [vmem:[%s4] sm:$0x3]
    %v196 = vunpack.c.l.b16 %v162
    %v197 = vunpack.c.l.b16 %v163
    %v198 = vunpack.c.l.b16 %v164
    %v199 = vunpack.c.l.b16 %v165
    %v200 = vunpack.c.l.b16 %v166
    %v201 = vunpack.c.l.b16 %v167
    %v202 = vunpack.c.l.b16 %v168
    %v203 = vunpack.c.l.b16 %v169
    %v204 = vunpack.c.l.b16 %v170
    %v205 = vunpack.c.l.b16 %v171
    %v206 = vunpack.c.l.b16 %v172
    %v207 = vunpack.c.l.b16 %v173
    %v208 = vunpack.c.l.b16 %v174
    %v209 = vunpack.c.l.b16 %v175
    %v210 = vunpack.c.l.b16 %v176
    %v211 = vunpack.c.l.b16 %v177
    %v212 = vpack.c.b16 %v197, %v196
    %v213 = vpack.c.b16 %v199, %v198
    %v214 = vpack.c.b16 %v201, %v200
    %v215 = vpack.c.b16 %v203, %v202
    %v216 = vpack.c.b16 %v205, %v204
    %v217 = vpack.c.b16 %v207, %v206
    %v218 = vpack.c.b16 %v209, %v208
    %v219 = vpack.c.b16 %v211, %v210
    %228 = vmatprep.subr.bf16.mxu0 0
    %229 = vmatpush1.bf16.msra.mxu0 %v212
    %230 = vmatprep.subr.bf16.mxu0 0
    %231 = vmatpush1.bf16.msra.mxu0 %v213
    %232 = vmatprep.subr.bf16.mxu0 0
    %233 = vmatpush1.bf16.msra.mxu0 %v214
    %234 = vmatprep.subr.bf16.mxu0 0
    %235 = vmatpush1.bf16.msra.mxu0 %v215
    %236 = vmatprep.subr.bf16.mxu0 0
    %237 = vmatpush1.bf16.msra.mxu0 %v216
    %238 = vmatprep.subr.bf16.mxu0 0
    %239 = vmatpush1.bf16.msra.mxu0 %v217
    %240 = vmatprep.subr.bf16.mxu0 0
    %241 = vmatpush1.bf16.msra.mxu0 %v218
    %242 = vmatprep.subr.bf16.mxu0 0
    %243 = vmatpush1.bf16.msra.mxu0 %v219
    %244 = vmatprep.subr.bf16.mxu0 0
    %245 = vmatpush1.bf16.msra.mxu0 0
    %246 = vmatprep.subr.bf16.mxu0 0
    %247 = vmatpush1.bf16.msra.mxu0 0
    %248 = vmatprep.subr.bf16.mxu0 0
    %249 = vmatpush1.bf16.msra.mxu0 0
    %250 = vmatprep.subr.bf16.mxu0 0
    %251 = vmatpush1.bf16.msra.mxu0 0
    %252 = vmatprep.subr.bf16.mxu0 0
    %253 = vmatpush1.bf16.msra.mxu0 0
    %254 = vmatprep.subr.bf16.mxu0 0
    %255 = vmatpush1.bf16.msra.mxu0 0
    %256 = vmatprep.subr.bf16.mxu0 0
    %257 = vmatpush1.bf16.msra.mxu0 0
    %258 = vmatprep.subr.bf16.mxu0 0
    %259 = vmatpush1.bf16.msra.mxu0 0
    %260 = vmatprep.mubr.bf16.mxu0 0
    %261 = vmatmul.mubr.bf16.gmra.mrb[0].mxu0 %v178
    %v262 = vpop.f32.mrb[0].mxu0
    %v263 = vadd.f32 %v179, %v262
    %v264 = vpop.f32.mrb[0].mxu0
    %v265 = vpop.f32.mrb[0].mxu0
    %v266 = vpop.f32.mrb[0].mxu0
    %267 = vdwg.mxu0
    %v268 = vxor.u32 %v263, 2147483648
    %v269 = vmul.f32 %v268, 1.442695
    %v270 = vpow.pop %v269
    %v271 = vadd.f32 %v270, 1.0
    %v272 = vrcp.pop %v271
    %v273 = vmul.f32 1.0, %v272
    %v274 = vmul.f32 %v263, %v273
    %v275 = vld [vmem:[#allocation10] sm:$0xf]
    %v276 = vld [vmem:[#allocation10 + $0x4] sm:$0xf]
    %v277 = vld [vmem:[#allocation10 + $0x8] sm:$0xf]
    %v278 = vld [vmem:[#allocation10 + $0xc] sm:$0xf]
    %v279 = vld [vmem:[#allocation10 + $0x10] sm:$0xf]
    %v280 = vld [vmem:[#allocation10 + $0x14] sm:$0xf]
    %v281 = vld [vmem:[#allocation10 + $0x18] sm:$0xf]
    %v282 = vld [vmem:[#allocation10 + $0x1c] sm:$0xf]
    %v283 = vld [vmem:[#allocation10 + $0x20] sm:$0xf]
    %v284 = vld [vmem:[#allocation10 + $0x24] sm:$0xf]
    %v285 = vld [vmem:[#allocation10 + $0x28] sm:$0xf]
    %v286 = vld [vmem:[#allocation10 + $0x2c] sm:$0xf]
    %v287 = vld [vmem:[#allocation10 + $0x30] sm:$0xf]
    %v288 = vld [vmem:[#allocation10 + $0x34] sm:$0xf]
    %v289 = vld [vmem:[#allocation10 + $0x38] sm:$0xf]
    %v290 = vld [vmem:[#allocation10 + $0x3c] sm:$0xf]
    %v291 = vpack.c.bf16 %v274, %v274
    %v292 = vld [vmem:[%s6] sm:$0x3]
    %v309 = vunpack.c.l.b16 %v275
    %v310 = vunpack.c.l.b16 %v276
    %v311 = vunpack.c.l.b16 %v277
    %v312 = vunpack.c.l.b16 %v278
    %v313 = vunpack.c.l.b16 %v279
    %v314 = vunpack.c.l.b16 %v280
    %v315 = vunpack.c.l.b16 %v281
    %v316 = vunpack.c.l.b16 %v282
    %v317 = vunpack.c.l.b16 %v283
    %v318 = vunpack.c.l.b16 %v284
    %v319 = vunpack.c.l.b16 %v285
    %v320 = vunpack.c.l.b16 %v286
    %v321 = vunpack.c.l.b16 %v287
    %v322 = vunpack.c.l.b16 %v288
    %v323 = vunpack.c.l.b16 %v289
    %v324 = vunpack.c.l.b16 %v290
    %v325 = vpack.c.b16 %v310, %v309
    %v326 = vpack.c.b16 %v312, %v311
    %v327 = vpack.c.b16 %v314, %v313
    %v328 = vpack.c.b16 %v316, %v315
    %v329 = vpack.c.b16 %v318, %v317
    %v330 = vpack.c.b16 %v320, %v319
    %v331 = vpack.c.b16 %v322, %v321
    %v332 = vpack.c.b16 %v324, %v323
    %341 = vmatprep.subr.bf16.mxu0 0
    %342 = vmatpush1.bf16.msra.mxu0 %v325
    %343 = vmatprep.subr.bf16.mxu0 0
    %344 = vmatpush1.bf16.msra.mxu0 %v326
    %345 = vmatprep.subr.bf16.mxu0 0
    %346 = vmatpush1.bf16.msra.mxu0 %v327
    %347 = vmatprep.subr.bf16.mxu0 0
    %348 = vmatpush1.bf16.msra.mxu0 %v328
    %349 = vmatprep.subr.bf16.mxu0 0
    %350 = vmatpush1.bf16.msra.mxu0 %v329
    %351 = vmatprep.subr.bf16.mxu0 0
    %352 = vmatpush1.bf16.msra.mxu0 %v330
    %353 = vmatprep.subr.bf16.mxu0 0
    %354 = vmatpush1.bf16.msra.mxu0 %v331
    %355 = vmatprep.subr.bf16.mxu0 0
    %356 = vmatpush1.bf16.msra.mxu0 %v332
    %357 = vmatprep.subr.bf16.mxu0 0
    %358 = vmatpush1.bf16.msra.mxu0 0
    %359 = vmatprep.subr.bf16.mxu0 0
    %360 = vmatpush1.bf16.msra.mxu0 0
    %361 = vmatprep.subr.bf16.mxu0 0
    %362 = vmatpush1.bf16.msra.mxu0 0
    %363 = vmatprep.subr.bf16.mxu0 0
    %364 = vmatpush1.bf16.msra.mxu0 0
    %365 = vmatprep.subr.bf16.mxu0 0
    %366 = vmatpush1.bf16.msra.mxu0 0
    %367 = vmatprep.subr.bf16.mxu0 0
    %368 = vmatpush1.bf16.msra.mxu0 0
    %369 = vmatprep.subr.bf16.mxu0 0
    %370 = vmatpush1.bf16.msra.mxu0 0
    %371 = vmatprep.subr.bf16.mxu0 0
    %372 = vmatpush1.bf16.msra.mxu0 0
    %373 = vmatprep.mubr.bf16.mxu0 0
    %374 = vmatmul.mubr.bf16.gmra.mrb[0].mxu0 %v291
    %v375 = vpop.f32.mrb[0].mxu0
    %v376 = vadd.f32 %v292, %v375
    %v377 = vpop.f32.mrb[0].mxu0
    %v378 = vpop.f32.mrb[0].mxu0
    %v379 = vpop.f32.mrb[0].mxu0
    %380 = vdwg.mxu0
    %381 = vst [vmem:[#allocation11] sm:$0x3] %v376
    // Predicated region
    $region50: #{_zdrn_forward_jit.1} parent=1 // pred_check
      _
    $region51: #{_zdrn_forward_jit.1} parent=1 // pred_check_branch
      %383 = sbr.rel (0) target = $region53
    $region52: #{_zdrn_forward_jit.1} parent=1 // pred_region
      %s385 = ssub.s32 32, 32
      %386 = vsyncadd [#allocation4], %s385
      %s388 = sshll.u32 [#allocation11], 4
      %s389 = int_to_ptr.vmem [resolvable:$true] %s388
      %391 = dma.vmem_to_hbm [thread:$0]  %s389, 32, %s7, [#allocation4]
    $region53: #{_zdrn_forward_jit.1} parent=1 // pred_fallthru
      _
    // Predicated region
    $region54: #{_zdrn_forward_jit.1} parent=1 // pred_check
      _
    $region55: #{_zdrn_forward_jit.1} parent=1 // pred_check_branch
      %393 = sbr.rel (0) target = $region57
    $region56: #{_zdrn_forward_jit.1} parent=1 // pred_region
      %394 = dma.done [#allocation4], 32
    $region57: #{_zdrn_forward_jit.1} parent=1 // pred_fallthru
      _
    %395 = vsyncpa [#allocation3], 1
    %396 = vsyncpa [#allocation6], 1
    %397 = vsyncpa [#allocation9], 1
    %398 = vsyncpa [#allocation4], 1

</llo_original>
